<compile_context>
chip_gen: v7x
topology: tpu7x:2x2x1
jax: 0.10.0
libtpu: 0.0.40
codegen_flags: <defaults>
</compile_context>

<pallas_src>
import functools

import jax
import jax.numpy as jnp
from jax.experimental import pallas as pl
from jax.experimental.pallas import tpu as pltpu


def _conv_sigmoid_gate(p, w_ref, k, pad):
    """k-tap zero-padded conv over the channel (sublane) axis, then sigmoid.

    p:     (1, C, 1) f32 per-channel means.
    w_ref: (k,) f32 SMEM ref (Conv1d(1, 1, k, bias=False) weight).
    Returns the (1, C, 1) f32 gate.  Matches PyTorch cross-correlation conv.
    """
    c = p.shape[1]
    if pad > 0:
        z = jnp.zeros((1, pad, 1), jnp.float32)
        pp = jnp.concatenate([z, p, z], axis=1)            # (1, C + 2*pad, 1)
    else:
        pp = p
    logic = w_ref[0] * pp[:, 0:c, :]
    for j in range(1, k):
        logic = logic + w_ref[j] * pp[:, j:j + c, :]
    return jax.nn.sigmoid(logic)


def _eca_fused_kernel(w_ref, x_ref, o_ref, *, inv_hw, k, pad):
    """Single-pass ECA: pool + channel conv + sigmoid + scale for one sample.

    w_ref: (k,)        f32 SMEM
    x_ref: (1, C, HW)  input slab (lane-dense spatial axis)
    o_ref: (1, C, HW)  output slab
    """
    x = x_ref[...].astype(jnp.float32)
    p = jnp.sum(x, axis=2, keepdims=True) * inv_hw          # (1, C, 1) mean
    gate = _conv_sigmoid_gate(p, w_ref, k, pad)             # (1, C, 1)
    o_ref[...] = (x * gate).astype(o_ref.dtype)


def _pool_gate_kernel(w_ref, x_ref, gate_ref, *, inv_hw, hw, lt, k, pad, ragged):
    """Pass 1 of the fallback path: spatial mean + conv + sigmoid -> gate.

    gate_ref (1, C, 1) stays resident across the spatial-tile axis and acts as
    the f32 sum accumulator; the final tile converts it to the sigmoid gate.
    """
    t = pl.program_id(1)

    @pl.when(t == 0)
    def _init():
        gate_ref[...] = jnp.zeros_like(gate_ref)

    x = x_ref[...].astype(jnp.float32)                      # (1, C, LT)
    if ragged:
        # Mask lanes beyond the true spatial extent (no HBM-level padding:
        # out-of-bounds block reads are unspecified, so they MUST be zeroed
        # before entering the sum).
        lane = jax.lax.broadcasted_iota(jnp.int32, x.shape, 2)
        x = jnp.where(lane < (hw - t * lt), x, 0.0)
    gate_ref[...] += jnp.sum(x, axis=2, keepdims=True)

    @pl.when(t == pl.num_programs(1) - 1)
    def _finalize():
        p = gate_ref[...] * inv_hw
        gate_ref[...] = _conv_sigmoid_gate(p, w_ref, k, pad)


def _scale_kernel(x_ref, gate_ref, o_ref):
    """Pass 2 of the fallback path: o = x * gate (per-channel lane splat)."""
    o_ref[...] = (x_ref[...].astype(jnp.float32) * gate_ref[...]).astype(o_ref.dtype)


def _pick_lane_tile(C, HW, itemsize, max_lane_tile, target_block_bytes,
                    max_block_bytes):
    """Lane tile sized from a byte budget (multiple of 128)."""
    full = pl.cdiv(HW, 128) * 128
    lt = max(128, (int(target_block_bytes) // (C * itemsize)) // 128 * 128)
    cap = max(128, (int(max_block_bytes) // (C * itemsize)) // 128 * 128)
    lt = min(lt, cap, full)
    if max_lane_tile is not None:
        lt = min(lt, max(128, (int(max_lane_tile) // 128) * 128))
    return lt


def eca_forward(x, conv_w, *, fused_slab_bytes=4 << 20, max_lane_tile=None,
                target_block_bytes=2 << 20, max_block_bytes=4 << 20):
    """x: (N, C, H, W), conv_w: (k,) — ECA forward (k must be odd)."""
    N, C, H, W = x.shape
    k = int(conv_w.shape[0])
    assert k % 2 == 1, "ECA uses an odd Conv1d kernel size"
    pad = (k - 1) // 2
    HW = H * W
    itemsize = jnp.dtype(x.dtype).itemsize
    inv_hw = 1.0 / float(HW)

    xf = x.reshape(N, C, HW)                               # metadata-only reshape
    w = conv_w.reshape(k).astype(jnp.float32)
    w_spec = pl.BlockSpec(memory_space=pltpu.MemorySpace.SMEM)

    # ---- Fused single-pass path: one sample slab fits the VMEM budget. ----
    if C * HW * itemsize <= fused_slab_bytes:
        of = pl.pallas_call(
            functools.partial(_eca_fused_kernel, inv_hw=inv_hw, k=k, pad=pad),
            out_shape=jax.ShapeDtypeStruct((N, C, HW), x.dtype),
            grid=(N,),
            in_specs=[w_spec,
                      pl.BlockSpec((1, C, HW), lambda n: (n, 0, 0))],
            out_specs=pl.BlockSpec((1, C, HW), lambda n: (n, 0, 0)),
            compiler_params=pltpu.CompilerParams(
                dimension_semantics=("parallel",),
                vmem_limit_bytes=48 << 20),
            cost_estimate=pl.CostEstimate(
                flops=2 * N * C * HW + 2 * N * C * k,
                transcendentals=N * C,
                bytes_accessed=2 * N * C * HW * itemsize + k * 4),
        )(w, xf)
        return of.reshape(N, C, H, W)

    # ---- Two-pass fallback: spatial tiling with in-kernel ragged tail. ----
    LT = _pick_lane_tile(C, HW, itemsize, max_lane_tile,
                         target_block_bytes, max_block_bytes)
    T = pl.cdiv(HW, LT)
    ragged = (HW % LT) != 0

    # Pass 1: global average pool + channel conv + sigmoid -> gate (N, C, 1).
    gate = pl.pallas_call(
        functools.partial(_pool_gate_kernel, inv_hw=inv_hw, hw=HW, lt=LT,
                          k=k, pad=pad, ragged=ragged),
        out_shape=jax.ShapeDtypeStruct((N, C, 1), jnp.float32),
        grid=(N, T),
        in_specs=[w_spec,
                  pl.BlockSpec((1, C, LT), lambda n, t: (n, 0, t))],
        out_specs=pl.BlockSpec((1, C, 1), lambda n, t: (n, 0, 0)),
        compiler_params=pltpu.CompilerParams(
            dimension_semantics=("parallel", "arbitrary"),
            vmem_limit_bytes=32 << 20),
        cost_estimate=pl.CostEstimate(
            flops=N * C * HW + 2 * N * C * k,
            transcendentals=N * C,
            bytes_accessed=N * C * HW * itemsize + N * C * 4 + k * 4),
    )(w, xf)

    # Pass 2: streaming scale out = x * gate.
    of = pl.pallas_call(
        _scale_kernel,
        out_shape=jax.ShapeDtypeStruct((N, C, HW), x.dtype),
        grid=(N, T),
        in_specs=[pl.BlockSpec((1, C, LT), lambda n, t: (n, 0, t)),
                  pl.BlockSpec((1, C, 1), lambda n, t: (n, 0, 0))],
        out_specs=pl.BlockSpec((1, C, LT), lambda n, t: (n, 0, t)),
        compiler_params=pltpu.CompilerParams(
            dimension_semantics=("parallel", "parallel"),
            vmem_limit_bytes=32 << 20),
        cost_estimate=pl.CostEstimate(
            flops=N * C * HW,
            transcendentals=0,
            bytes_accessed=2 * N * C * HW * itemsize + N * C * 4),
    )(xf, gate)

    return of.reshape(N, C, H, W)


def eca_reference(x, conv_w):
    """Plain-JAX reference mirroring the PyTorch forward."""
    N, C, H, W = x.shape
    k = conv_w.shape[0]
    pad = (k - 1) // 2
    pooled = jnp.mean(x, axis=(2, 3))                       # (N, C)
    pp = jnp.pad(pooled, ((0, 0), (pad, pad)))              # zero-padded channel seq
    logic = sum(conv_w[j] * pp[:, j:j + C] for j in range(k))
    gate = jax.nn.sigmoid(logic)[:, :, None, None]          # (N, C, 1, 1)
    return x * gate


if __name__ == "__main__":
    key = jax.random.PRNGKey(0)
    kx, kw, kx2, kx3 = jax.random.split(key, 4)

    # Case 1: fused single-pass path (sample slab fits VMEM budget).
    N, C, H, W = 2, 4, 16, 16
    x = jax.random.normal(kx, (N, C, H, W), dtype=jnp.float32)
    conv_w = jax.random.normal(kw, (3,), dtype=jnp.float32) * 0.5
    out = jax.block_until_ready(eca_forward(x, conv_w))
    ref = eca_reference(x, conv_w)
    assert out.shape == x.shape and out.dtype == x.dtype
    assert jnp.allclose(out, ref, atol=1e-5, rtol=1e-5), "fused path mismatch"

    # Case 2: two-pass path, ragged spatial tail (H*W = 117), C not multiple of 8.
    x2 = jax.random.normal(kx2, (2, 10, 9, 13), dtype=jnp.float32)
    out2 = jax.block_until_ready(
        eca_forward(x2, conv_w, fused_slab_bytes=0, max_lane_tile=128))
    ref2 = eca_reference(x2, conv_w)
    assert jnp.allclose(out2, ref2, atol=1e-5, rtol=1e-5), "2-pass (T=1) mismatch"

    # Case 3: two-pass path, several spatial tiles with a ragged last tile, k=5.
    conv_w5 = jax.random.normal(kw, (5,), dtype=jnp.float32) * 0.5
    x3 = jax.random.normal(kx3, (1, 6, 24, 24), dtype=jnp.float32)
    out3 = jax.block_until_ready(
        eca_forward(x3, conv_w5, fused_slab_bytes=0, max_lane_tile=128))
    ref3 = eca_reference(x3, conv_w5)
    assert jnp.allclose(out3, ref3, atol=1e-5, rtol=1e-5), "2-pass (T>1) mismatch"

    print("KERNEL_OK")
</pallas_src>

<mosaic_0001>
module attributes {stable_mosaic.version = 11 : i64} {
  func.func @_eca_fused_kernel(%arg0: i32, %arg1: memref<3xf32, #tpu.memory_space<smem>>, %arg2: memref<1x4x256xf32, #tpu.memory_space<vmem>>, %arg3: memref<1x4x256xf32, #tpu.memory_space<vmem>>) attributes {dimension_semantics = [#tpu.dimension_semantics<parallel>], iteration_bounds = array<i64: 2>, scalar_prefetch = 0 : i64, scratch_operands = 0 : i64, tpu.core_type = #tpu.core_type<tc>, window_params = [{transform_indices = @transform_0, window_bounds = array<i64: 3>}, {transform_indices = @transform_1, window_bounds = array<i64: 1, 4, 256>}, {transform_indices = @transform_2, window_bounds = array<i64: 1, 4, 256>}]} {
    %c0 = arith.constant 0 : index
    %c0_0 = arith.constant 0 : index
    %c0_1 = arith.constant 0 : index
    %0 = vector.load %arg2[%c0, %c0_0, %c0_1] : memref<1x4x256xf32, #tpu.memory_space<vmem>>, vector<1x4x256xf32>
    %cst = arith.constant dense<0.000000e+00> : vector<1x4xf32>
    %1 = vector.multi_reduction <add>, %0, %cst [2] : vector<1x4x256xf32> to vector<1x4xf32>
    %2 = vector.shape_cast %1 : vector<1x4xf32> to vector<1x4x1xf32>
    %cst_2 = arith.constant 3.906250e-03 : f32
    %3 = vector.broadcast %cst_2 : f32 to vector<1x4x1xf32>
    %4 = arith.mulf %2, %3 : vector<1x4x1xf32>
    %cst_3 = arith.constant 0.000000e+00 : f32
    %5 = vector.broadcast %cst_3 : f32 to vector<1x1x1xf32>
    %6 = tpu.concatenate %5, %4, %5 in 1 : vector<1x1x1xf32>, vector<1x4x1xf32>, vector<1x1x1xf32> -> vector<1x6x1xf32>
    %c0_4 = arith.constant 0 : index
    %7 = memref.load %arg1[%c0_4] : memref<3xf32, #tpu.memory_space<smem>>
    %8 = vector.extract_strided_slice %6 {offsets = [0, 0, 0], sizes = [1, 4, 1], strides = [1, 1, 1]} : vector<1x6x1xf32> to vector<1x4x1xf32>
    %9 = vector.broadcast %7 : f32 to vector<1x4x1xf32>
    %10 = arith.mulf %9, %8 : vector<1x4x1xf32>
    %c1 = arith.constant 1 : index
    %11 = memref.load %arg1[%c1] : memref<3xf32, #tpu.memory_space<smem>>
    %12 = vector.extract_strided_slice %6 {offsets = [0, 1, 0], sizes = [1, 4, 1], strides = [1, 1, 1]} : vector<1x6x1xf32> to vector<1x4x1xf32>
    %13 = vector.broadcast %11 : f32 to vector<1x4x1xf32>
    %14 = arith.mulf %13, %12 : vector<1x4x1xf32>
    %15 = arith.addf %10, %14 : vector<1x4x1xf32>
    %c2 = arith.constant 2 : index
    %16 = memref.load %arg1[%c2] : memref<3xf32, #tpu.memory_space<smem>>
    %17 = vector.extract_strided_slice %6 {offsets = [0, 2, 0], sizes = [1, 4, 1], strides = [1, 1, 1]} : vector<1x6x1xf32> to vector<1x4x1xf32>
    %18 = vector.broadcast %16 : f32 to vector<1x4x1xf32>
    %19 = arith.mulf %18, %17 : vector<1x4x1xf32>
    %20 = arith.addf %15, %19 : vector<1x4x1xf32>
    %21 = arith.negf %20 : vector<1x4x1xf32>
    %22 = math.exp %21 : vector<1x4x1xf32>
    %cst_5 = arith.constant 1.000000e+00 : f32
    %23 = vector.broadcast %cst_5 : f32 to vector<1x4x1xf32>
    %24 = arith.addf %23, %22 : vector<1x4x1xf32>
    %25 = arith.divf %23, %24 : vector<1x4x1xf32>
    %26 = vector.broadcast %25 : vector<1x4x1xf32> to vector<1x4x256xf32>
    %27 = arith.mulf %0, %26 : vector<1x4x256xf32>
    %c0_6 = arith.constant 0 : index
    %c0_7 = arith.constant 0 : index
    %c0_8 = arith.constant 0 : index
    %28 = vector.load %arg3[%c0_6, %c0_7, %c0_8] : memref<1x4x256xf32, #tpu.memory_space<vmem>>, vector<1x4x256xf32>
    tpu.vector_store %arg3[%c0_6, %c0_7, %c0_8], %27 {strides = array<i32>} : memref<1x4x256xf32, #tpu.memory_space<vmem>>, vector<1x4x256xf32>,
    return
  }
  func.func @transform_0(%arg0: i32) -> i32 {
    %c0_i32 = arith.constant 0 : i32
    %c0_i32_0 = arith.constant 0 : i32
    return %c0_i32 : i32
  }
  func.func @transform_1(%arg0: i32) -> (i32, i32, i32) {
    %c0_i32 = arith.constant 0 : i32
    %c0_i32_0 = arith.constant 0 : i32
    %c0_i32_1 = arith.constant 0 : i32
    return %arg0, %c0_i32, %c0_i32_0 : i32, i32, i32
  }
  func.func @transform_2(%arg0: i32) -> (i32, i32, i32) {
    %c0_i32 = arith.constant 0 : i32
    %c0_i32_0 = arith.constant 0 : i32
    %c0_i32_1 = arith.constant 0 : i32
    return %arg0, %c0_i32, %c0_i32_0 : i32, i32, i32
  }
}

</mosaic_0001>

<llo_original>
// kernel: tpu_custom_call.1
$region0: #{tpu_custom_call.1}
  #allocation0 [shape = 'u32[]', space=smem, size = 0x4, offset = 0x4, fixed_abs, tag = 'smem constant byte address 0x4 - core index']
  #allocation1 [shape = 'u32[144,128]{1,0:T(1,128)}', space=vmem, size = 0x12000, scoped, tag = 'internal scratch']
  %s0 = inlined_call_operand.hbm [shape: f32[3], index: 0, kind: input, shape index: {}]
  %s1 = inlined_call_operand.hbm [shape: f32[2,4,256], index: 1, kind: input, shape index: {}]
  %s2 = inlined_call_operand.hbm [shape: f32[2,4,256], index: 2, kind: output, shape index: {}]
  %s3 = sld [smem:[#allocation0]]
  $region49: #{tpu_custom_call.1} parent=0
    _
  %s5 = ssub.s32 1, %s3
  %s6 = scalar_select 0, %s5, %s3
  $region1: #{tpu_custom_call.1} parent=0
    #allocation2 [shape = 'u8[512]{0}', space=smem, size = 0x200, scoped, tag = 'input window, operand 0, single buffered']
    #allocation3 [shape = 's32[2]{0}', space=sflag, size = 0x8, scoped, tag = 'scoped memory for tpu_custom_call.1']
    #allocation4 [shape = 's32[2]{0}', space=sflag, size = 0x8, scoped, tag = 'scoped memory for tpu_custom_call.1']
    #allocation5 [shape = 's32[2]{0}', space=sflag, size = 0x8, scoped, tag = 'scoped memory for tpu_custom_call.1']
    #allocation6 [shape = 'u8[8192]{0}', space=vmem, size = 0x2000, scoped, tag = 'input window, operand 1']
    #allocation7 [shape = 'u8[8192]{0}', space=vmem, size = 0x2000, scoped, tag = 'output window, operand 0']
    %7 = vsyncpa [#allocation5], 0
    %8 = vsyncpa [#allocation3], 0
    %s9 = scalar_lea.sflag [#allocation3], 1
    %10 = vsyncpa %s9, 0
    %11 = vsyncpa [#allocation4], 0
    %s12 = scalar_lea.sflag [#allocation4], 1
    %13 = vsyncpa %s12, 0
    loop: start=0, step=1, limit=4
    $region2: #{tpu_custom_call.1} parent=1 // loop_pre_header
      _
    $region3: #{tpu_custom_call.1} parent=1 // loop_header
      %s15 = sphi 0, %s19
      %p16 = scmp.ge.s32.totalorder %s15, 4
      %s23 = sphi 0, %s23
      %s25 = sphi 0, %s23
      %s26 = sphi 0, %s25
      %s40 = sphi 0, %s26
      %s46 = sphi 0, %s48
      %s49 = sphi 0, %s46
      %s50 = sphi 0, %s49
      %s66 = sphi 0, %s50
      %s72 = sphi 0, %s74
      %s75 = sphi 0, %s72
      %s76 = sphi 0, %s75
      %s92 = sphi 0, %s76
    $region4: #{tpu_custom_call.1} parent=1 // loop_header_branch
      %18 = sbr.rel (%p16) target = $region8
    $region5: #{tpu_custom_call.1} parent=1 // loop_body
      %s20 = ssub.s32 %s15, 1
      %s21 = ssub.s32 %s15, 2
      %s22 = sadd.s32 %s15, 1
      %s24 = sadd.s32 %s23, 1
      %p27 = scmp.eq.s32.totalorder %s15, 1
      %p28 = scmp.ne.s32.totalorder %s23, %s25
      %p29 = scmp.eq.s32.totalorder %s15, 0
      %p30 = por %p28, %p29
      %p31 = scmp.ne.s32.totalorder %s23, %s25
      %p32 = scmp.eq.s32.totalorder %s20, 1
      %p33 = por %p31, %p32
      %p34 = scmp.ne.s32.totalorder %s25, %s26
      %p35 = scmp.eq.s32.totalorder %s20, 0
      %p36 = por %p34, %p35
      %p37 = scmp.ne.s32.totalorder %s25, %s26
      %p38 = scmp.eq.s32.totalorder %s21, 1
      %p39 = por %p37, %p38
      %p41 = scmp.ne.s32.totalorder %s26, %s40
      %p42 = scmp.eq.s32.totalorder %s21, 0
      %p43 = por %p41, %p42
      %s44 = ssub.s32 %s15, %s22
      %p45 = scmp.eq.s32.totalorder %s44, 0
      %s47 = sadd.s32 %s46, 1
      %s48 = scalar_select %p45, %s46, %s47
      %p51 = pneg %p45
      %p52 = scmp.eq.s32.totalorder %s15, 1
      %p53 = por %p51, %p52
      %p54 = scmp.ne.s32.totalorder %s46, %s49
      %p55 = scmp.eq.s32.totalorder %s15, 0
      %p56 = por %p54, %p55
      %p57 = scmp.ne.s32.totalorder %s46, %s49
      %p58 = scmp.eq.s32.totalorder %s20, 1
      %p59 = por %p57, %p58
      %p60 = scmp.ne.s32.totalorder %s49, %s50
      %p61 = scmp.eq.s32.totalorder %s20, 0
      %p62 = por %p60, %p61
      %p63 = scmp.ne.s32.totalorder %s49, %s50
      %p64 = scmp.eq.s32.totalorder %s21, 1
      %p65 = por %p63, %p64
      %p67 = scmp.ne.s32.totalorder %s50, %s66
      %p68 = scmp.eq.s32.totalorder %s21, 0
      %p69 = por %p67, %p68
      %s70 = ssub.s32 %s15, %s22
      %p71 = scmp.eq.s32.totalorder %s70, 0
      %s73 = sadd.s32 %s72, 1
      %s74 = scalar_select %p71, %s72, %s73
      %p77 = pneg %p71
      %p78 = scmp.eq.s32.totalorder %s15, 1
      %p79 = por %p77, %p78
      %p80 = scmp.ne.s32.totalorder %s72, %s75
      %p81 = scmp.eq.s32.totalorder %s15, 0
      %p82 = por %p80, %p81
      %p83 = scmp.ne.s32.totalorder %s72, %s75
      %p84 = scmp.eq.s32.totalorder %s20, 1
      %p85 = por %p83, %p84
      %p86 = scmp.ne.s32.totalorder %s75, %s76
      %p87 = scmp.eq.s32.totalorder %s20, 0
      %p88 = por %p86, %p87
      %p89 = scmp.ne.s32.totalorder %s75, %s76
      %p90 = scmp.eq.s32.totalorder %s21, 1
      %p91 = por %p89, %p90
      %p93 = scmp.ne.s32.totalorder %s76, %s92
      %p94 = scmp.eq.s32.totalorder %s21, 0
      %p95 = por %p93, %p94
      %p96 = scmp.le.s32.totalorder 1, %s15
      %p97 = scmp.lt.s32.totalorder %s15, 3
      %p98 = pnand %p96, %p97
      %p99 = pneg %p98
      // Predicated region
      $region9: #{tpu_custom_call.1} parent=5 // pred_check
        _
      $region10: #{tpu_custom_call.1} parent=5 // pred_check_branch
        %101 = sbr.rel (%p98) target = $region12
      $region11: #{tpu_custom_call.1} parent=5 // pred_region
        %s102 = ssub.s32 %s15, 1
        // Predicated region
        $region13: #{tpu_custom_call.1} parent=11 // pred_check
          %p103 = pneg %p36
        $region14: #{tpu_custom_call.1} parent=11 // pred_check_branch
          %105 = sbr.rel (%p103) target = $region16
        $region15: #{tpu_custom_call.1} parent=11 // pred_region
          %s107 = ssub.s32 16, 16
          %108 = vsyncadd [#allocation5], %s107
          %111 = dma.hbm_to_smem %s0, 16, [#allocation2], [#allocation5]
        $region16: #{tpu_custom_call.1} parent=11 // pred_fallthru
          _
      $region12: #{tpu_custom_call.1} parent=5 // pred_fallthru
        _
      %p112 = scmp.lt.s32.totalorder %s15, 2
      // Predicated region
      $region17: #{tpu_custom_call.1} parent=5 // pred_check
        %p113 = pneg %p112
      $region18: #{tpu_custom_call.1} parent=5 // pred_check_branch
        %115 = sbr.rel (%p113) target = $region20
      $region19: #{tpu_custom_call.1} parent=5 // pred_region
        // Predicated region
        $region21: #{tpu_custom_call.1} parent=19 // pred_check
          %p116 = pneg %p56
        $region22: #{tpu_custom_call.1} parent=19 // pred_check_branch
          %118 = sbr.rel (%p116) target = $region24
        $region23: #{tpu_custom_call.1} parent=19 // pred_region
          %s119 = sand.u32 %s46, 1
          %s120 = scalar_lea.sflag [#allocation3], %s119
          %s121 = sand.u32 %s46, 1
          %s122 = smul.addr %s121, 8
          %s123 = scalar_lea.vmem [#allocation6], %s122
          %s125 = ssub.s32 128, 128
          %126 = vsyncadd %s120, %s125
          %s127 = smul.addr %s15, 2
          %s128 = smul.addr %s127, 64
          %s129 = scalar_lea.hbm %s1, %s128
          %s131 = sshll.u32 %s123, 4
          %s132 = int_to_ptr.vmem [resolvable:$true] %s131
          %134 = dma.hbm_to_vmem [thread:$0]  %s129, 128, %s132, %s120
        $region24: #{tpu_custom_call.1} parent=19 // pred_fallthru
          _
      $region20: #{tpu_custom_call.1} parent=5 // pred_fallthru
        _
      %p135 = scmp.le.s32.totalorder 1, %s15
      %p136 = scmp.lt.s32.totalorder %s15, 3
      %p137 = pnand %p135, %p136
      %p138 = pneg %p137
      // Predicated region
      $region25: #{tpu_custom_call.1} parent=5 // pred_check
        _
      $region26: #{tpu_custom_call.1} parent=5 // pred_check_branch
        %140 = sbr.rel (%p137) target = $region28
      $region27: #{tpu_custom_call.1} parent=5 // pred_region
        %s141 = ssub.s32 %s15, 1
        // Predicated region
        $region29: #{tpu_custom_call.1} parent=27 // pred_check
          %p142 = pneg %p36
        $region30: #{tpu_custom_call.1} parent=27 // pred_check_branch
          %144 = sbr.rel (%p142) target = $region32
        $region31: #{tpu_custom_call.1} parent=27 // pred_region
          %145 = dma.done [#allocation5], 16
        $region32: #{tpu_custom_call.1} parent=27 // pred_fallthru
          _
        %s146 = sand.u32 %s49, 1
        %s147 = scalar_lea.sflag [#allocation3], %s146
        %s148 = sand.u32 %s49, 1
        %s149 = smul.addr %s148, 8
        %s150 = scalar_lea.vmem [#allocation6], %s149
        // Predicated region
        $region33: #{tpu_custom_call.1} parent=27 // pred_check
          %p151 = pneg %p62
        $region34: #{tpu_custom_call.1} parent=27 // pred_check_branch
          %153 = sbr.rel (%p151) target = $region36
        $region35: #{tpu_custom_call.1} parent=27 // pred_region
          %154 = dma.done %s147, 128
        $region36: #{tpu_custom_call.1} parent=27 // pred_fallthru
          _
        %155 = sfence
        %p156 = pneg %p36
        %p157 = pneg %p33
        %s158 = sand.u32 %s49, 1
        %s159 = scalar_lea.sflag [#allocation3], %s158
        %s160 = sand.u32 %s49, 1
        %s161 = smul.addr %s160, 8
        %s162 = scalar_lea.vmem [#allocation6], %s161
        %p163 = pneg %p62
        %p164 = pneg %p59
        %p165 = pneg %p88
        %p166 = pneg %p85
        %s167 = sand.u32 %s75, 1
        %s168 = scalar_lea.sflag [#allocation4], %s167
        %s169 = sand.u32 %s75, 1
        %s170 = smul.addr %s169, 8
        %s171 = scalar_lea.vmem [#allocation7], %s170
        %v172 = vld [vmem:[%s150] sm:$0xff]
        %v174 = vcombine.high %v172, %v172
        %vm176 = vcmask 1043456
        %v177 = vsel %vm176, %v172, 0.0
        %v178 = vsel %vm176, %v174, 0.0
        %v179 = vadd.f32 %v177, %v178
        %180 = vadd.xlane.f32.xlu0 %v179
        %v181 = vpop.xlane.xlu0 %180
        %v182 = vmul.f32 %v181, 0.00390625
        %v184 = vrot.slane %v182, 7
        %vm186 = vcmask 1040384
        %v187 = vsel %vm186, 0.0, %v184
        %vm188 = vcmask 1044480
        %v189 = vsel %vm188, %v187, 0.0
        %s190 = sld [smem:[#allocation2]]
        %v191 = vstv %s190
        %v192 = vmul.f32 %v191, %v189
        %s193 = sld [smem:[#allocation2 + $0x1]]
        %v194 = vstv %s193
        %v195 = vmul.f32 %v194, %v189
        %v197 = vrot.slane %v195, 1
        %v199 = vadd.f32 %v192, %v197
        %s200 = sld [smem:[#allocation2 + $0x2]]
        %v201 = vstv %s200
        %v202 = vmul.f32 %v201, %v189
        %v204 = vrot.slane %v202, 2
        %v206 = vadd.f32 %v199, %v204
        %v207 = vxor.u32 %v206, 2147483648
        %v208 = vmul.f32 %v207, 1.442695
        %v209 = vpow.pop %v208
        %v210 = vadd.f32 %v209, 1.0
        %v211 = vrcp.pop %v210
        %v212 = vmul.f32 1.0, %v211
        %214 = vset.pattern.permute.xlu0 0
        %215 = vperm.xlu0 %214, %v212
        %v216 = vpop.permute.xlu0 %215
        %v218 = vunpack.c.l.s4 839922192
        %v219 = vunpack.c.0.s8 %v218
        %v220 = vlaneseq
        %v221 = vshrl.u32 %v220, 7
        %v222 = vsub.s32 %v219, %v221
        %v223 = vrot.slane %v216, %v222
        %v225 = vmul.f32 %v172, %v223
        %226 = vst [vmem:[%s171] sm:$0xff] %v225
        %s227 = sand.u32 %s75, 1
        %s228 = scalar_lea.sflag [#allocation4], %s227
        %s229 = sand.u32 %s75, 1
        %s230 = smul.addr %s229, 8
        %s231 = scalar_lea.vmem [#allocation7], %s230
        // Predicated region
        $region37: #{tpu_custom_call.1} parent=27 // pred_check
          %p232 = pneg %p85
        $region38: #{tpu_custom_call.1} parent=27 // pred_check_branch
          %234 = sbr.rel (%p232) target = $region40
        $region39: #{tpu_custom_call.1} parent=27 // pred_region
          %s236 = ssub.s32 128, 128
          %237 = vsyncadd %s228, %s236
          %s238 = smul.addr %s20, 2
          %s239 = smul.addr %s238, 64
          %s240 = scalar_lea.hbm %s2, %s239
          %s242 = sshll.u32 %s231, 4
          %s243 = int_to_ptr.vmem [resolvable:$true] %s242
          %245 = dma.vmem_to_hbm [thread:$0]  %s243, 128, %s240, %s228
        $region40: #{tpu_custom_call.1} parent=27 // pred_fallthru
          _
      $region28: #{tpu_custom_call.1} parent=5 // pred_fallthru
        _
      %p246 = scmp.le.s32.totalorder 2, %s15
      // Predicated region
      $region41: #{tpu_custom_call.1} parent=5 // pred_check
        %p247 = pneg %p246
      $region42: #{tpu_custom_call.1} parent=5 // pred_check_branch
        %249 = sbr.rel (%p247) target = $region44
      $region43: #{tpu_custom_call.1} parent=5 // pred_region
        %s250 = ssub.s32 %s15, 2
        // Predicated region
        $region45: #{tpu_custom_call.1} parent=43 // pred_check
          %p251 = pneg %p91
        $region46: #{tpu_custom_call.1} parent=43 // pred_check_branch
          %253 = sbr.rel (%p251) target = $region48
        $region47: #{tpu_custom_call.1} parent=43 // pred_region
          %s254 = sand.u32 %s76, 1
          %s255 = scalar_lea.sflag [#allocation4], %s254
          %s256 = sand.u32 %s76, 1
          %s257 = smul.addr %s256, 8
          %s258 = scalar_lea.vmem [#allocation7], %s257
          %259 = dma.done %s255, 128
        $region48: #{tpu_custom_call.1} parent=43 // pred_fallthru
          _
      $region44: #{tpu_custom_call.1} parent=5 // pred_fallthru
        _
    $region6: #{tpu_custom_call.1} parent=1 // loop_footer
      %s19 = sadd.s32 1, %s15
    $region7: #{tpu_custom_call.1} parent=1 // loop_footer_branch
      %14 = sbr.rel target = $region3
    $region8: #{tpu_custom_call.1} parent=1 // loop_exit
      _
    %260 = vsyncpa [#allocation3], 1
    %s261 = scalar_lea.sflag [#allocation3], 1
    %262 = vsyncpa %s261, 1
    %263 = vsyncpa [#allocation4], 1
    %s264 = scalar_lea.sflag [#allocation4], 1
    %265 = vsyncpa %s264, 1
    %266 = vsyncpa [#allocation5], 1
    %s267 = scalar_lea.sflag [#allocation5], 1
    %268 = vsyncpa %s267, 1

</llo_original>
